<compile_context>
chip_gen: v5e
topology: v5e:2x2
jax: 0.10.0
libtpu: 0.0.40
codegen_flags: <defaults>
</compile_context>

<pallas_src>
import jax
import jax.numpy as jnp
from jax.experimental import pallas as pl
from jax.experimental.pallas import tpu as pltpu

_LANE = 128
_ROW = 32  # keep 4*tm a multiple of 128 so the fused matmul fills the MXU


def _td_kernel(x_ref, scale_ref, shift_ref, w_ref, b_ref, o_ref):
    """x:(4,TM,C)  scale/shift:(1,C)  w:(C,TN)  b:(1,TN)  o:(TM,TN)."""
    _, tm, c = x_ref.shape
    # BN (folded) + ReLU applied once to all four window positions.
    y = x_ref[...].reshape(4 * tm, c)
    y = jnp.maximum(y * scale_ref[...] + shift_ref[...], 0.0)
    # Single fused 1x1-conv matmul on the MXU (f32 accumulation).
    z = jnp.dot(y.astype(w_ref.dtype), w_ref[...],
                preferred_element_type=jnp.float32)            # (4*TM, TN)
    # MaxPool2d(2): elementwise max over the four window positions; bias is
    # constant per output channel, so add it once after the max.
    p01 = jnp.maximum(z[0 * tm:1 * tm], z[1 * tm:2 * tm])
    p23 = jnp.maximum(z[2 * tm:3 * tm], z[3 * tm:4 * tm])
    pooled = jnp.maximum(p01, p23) + b_ref[...]
    o_ref[...] = pooled.astype(o_ref.dtype)


def _round_up(v, m):
    return ((v + m - 1) // m) * m


def transition_down(x, gamma, beta, rmean, rvar, conv_w, conv_b, *,
                    eps=1e-5, tm=256, tn=512, compute_dtype=jnp.bfloat16):
    """x: (N, C, H, W) float32 (NCHW, like PyTorch). Returns (N, C, H//2, W//2)."""
    N, C, H, W = x.shape
    assert H % 2 == 0 and W % 2 == 0
    Ho, Wo = H // 2, W // 2
    M = N * Ho * Wo

    # ---- tile sizing ---------------------------------------------------------
    tm = max(_ROW, min(int(tm), _round_up(M, _ROW)))
    tm = _round_up(tm, _ROW)
    Mp = _round_up(M, tm)                       # padded row count

    tn = max(_LANE, _round_up(min(int(tn), max(C, 1)), _LANE))
    Cp = _round_up(C, tn)                       # lane-dense output channels

    # ---- XLA glue: NCHW -> window-major (4, M, C) (one fused transpose) ------
    xw = x.reshape(N, C, Ho, 2, Wo, 2)
    xw = jnp.transpose(xw, (3, 5, 0, 2, 4, 1)).reshape(4, M, C)
    if Mp > M:
        xw = jnp.pad(xw, ((0, 0), (0, Mp - M), (0, 0)))

    # ---- fold BatchNorm (eval) into per-channel scale/shift ------------------
    inv_std = jax.lax.rsqrt(rvar.astype(jnp.float32) + eps)
    scale = (gamma * inv_std).reshape(1, C).astype(jnp.float32)
    shift = (beta - rmean * gamma * inv_std).reshape(1, C).astype(jnp.float32)

    # ---- 1x1-conv weight / bias, padded to lane-dense Cout -------------------
    wt = conv_w.reshape(C, C).T                                 # (Cin, Cout)
    b2 = conv_b.reshape(1, C).astype(jnp.float32)
    if Cp > C:
        wt = jnp.pad(wt, ((0, 0), (0, Cp - C)))
        b2 = jnp.pad(b2, ((0, 0), (0, Cp - C)))
    wt = wt.astype(compute_dtype)

    # ---- explicit VMEM budget (double-buffered blocks + headroom) ------------
    x_bytes = 4 * tm * C * jnp.dtype(x.dtype).itemsize
    w_bytes = C * tn * jnp.dtype(compute_dtype).itemsize
    o_bytes = tm * tn * jnp.dtype(x.dtype).itemsize
    need = 2 * (x_bytes + w_bytes + o_bytes) + (1 << 20)
    vmem_limit = int(max(2 * need, 16 * 1024 * 1024))

    grid = (Mp // tm, Cp // tn)

    out = pl.pallas_call(
        _td_kernel,
        out_shape=jax.ShapeDtypeStruct((Mp, Cp), x.dtype),
        grid_spec=pltpu.PrefetchScalarGridSpec(
            num_scalar_prefetch=0,
            grid=grid,
            in_specs=[
                pl.BlockSpec((4, tm, C), lambda i, j: (0, i, 0)),
                pl.BlockSpec((1, C), lambda i, j: (0, 0)),
                pl.BlockSpec((1, C), lambda i, j: (0, 0)),
                pl.BlockSpec((C, tn), lambda i, j: (0, j)),
                pl.BlockSpec((1, tn), lambda i, j: (0, j)),
            ],
            out_specs=pl.BlockSpec((tm, tn), lambda i, j: (i, j)),
        ),
        compiler_params=pltpu.CompilerParams(
            dimension_semantics=("parallel", "parallel"),
            vmem_limit_bytes=vmem_limit),
    )(xw, scale, shift, wt, b2)

    out = out[:M, :C].reshape(N, Ho, Wo, C)
    return jnp.transpose(out, (0, 3, 1, 2))                     # back to NCHW


def _reference(x, gamma, beta, rmean, rvar, conv_w, conv_b, eps=1e-5):
    """Pure-JAX reference of the eval-mode PyTorch forward (NCHW)."""
    xn = (x - rmean[None, :, None, None]) / jnp.sqrt(rvar[None, :, None, None] + eps)
    xn = xn * gamma[None, :, None, None] + beta[None, :, None, None]
    xr = jnp.maximum(xn, 0.0)
    W2 = conv_w.reshape(conv_w.shape[0], conv_w.shape[1])
    y = jnp.einsum('nchw,oc->nohw', xr, W2) + conv_b[None, :, None, None]
    N, C, H, Wd = y.shape
    return y.reshape(N, C, H // 2, 2, Wd // 2, 2).max(axis=(3, 5))


if __name__ == "__main__":
    key = jax.random.PRNGKey(0)
    k_x, k_g, k_b, k_rm, k_rv, k_w, k_cb = jax.random.split(key, 7)

    N, C, H, W = 2, 4, 16, 16
    x = jax.random.normal(k_x, (N, C, H, W), jnp.float32)

    # Deterministic synthetic parameters (nn.BatchNorm2d / nn.Conv2d(C, C, 1)).
    gamma = 1.0 + 0.1 * jax.random.normal(k_g, (C,), jnp.float32)
    beta = 0.1 * jax.random.normal(k_b, (C,), jnp.float32)
    rmean = 0.1 * jax.random.normal(k_rm, (C,), jnp.float32)
    rvar = 1.0 + 0.1 * jnp.abs(jax.random.normal(k_rv, (C,), jnp.float32))
    conv_w = 0.1 * jax.random.normal(k_w, (C, C, 1, 1), jnp.float32)
    conv_b = 0.1 * jax.random.normal(k_cb, (C,), jnp.float32)

    ref = _reference(x, gamma, beta, rmean, rvar, conv_w, conv_b)

    # Exact-math path (f32 MXU inputs): tight tolerance vs. the JAX reference.
    out_f32 = transition_down(x, gamma, beta, rmean, rvar, conv_w, conv_b,
                              compute_dtype=jnp.float32)
    out_f32 = jax.block_until_ready(out_f32)
    assert out_f32.shape == (N, C, H // 2, W // 2), out_f32.shape
    assert jnp.allclose(out_f32, ref, atol=1e-5, rtol=1e-5), \
        float(jnp.max(jnp.abs(out_f32 - ref)))

    # Fast path (default bf16 MXU inputs, f32 accumulate): looser tolerance.
    out_bf16 = transition_down(x, gamma, beta, rmean, rvar, conv_w, conv_b)
    out_bf16 = jax.block_until_ready(out_bf16)
    assert out_bf16.shape == (N, C, H // 2, W // 2), out_bf16.shape
    assert jnp.allclose(out_bf16, ref, atol=3e-2, rtol=3e-2), \
        float(jnp.max(jnp.abs(out_bf16 - ref)))

    print("KERNEL_OK")
</pallas_src>

<mosaic_0001>
module attributes {stable_mosaic.version = 11 : i64} {
  func.func @_td_kernel(%arg0: i32, %arg1: i32, %arg2: memref<4x128x4xf32, #tpu.memory_space<vmem>>, %arg3: memref<1x4xf32, #tpu.memory_space<vmem>>, %arg4: memref<1x4xf32, #tpu.memory_space<vmem>>, %arg5: memref<4x128xf32, #tpu.memory_space<vmem>>, %arg6: memref<1x128xf32, #tpu.memory_space<vmem>>, %arg7: memref<128x128xf32, #tpu.memory_space<vmem>>) attributes {dimension_semantics = [#tpu.dimension_semantics<parallel>, #tpu.dimension_semantics<parallel>], iteration_bounds = array<i64: 1, 1>, scalar_prefetch = 0 : i64, scratch_operands = 0 : i64, tpu.core_type = #tpu.core_type<tc>, window_params = [{transform_indices = @transform_0, window_bounds = array<i64: 4, 128, 4>}, {pipeline_mode = #tpu.pipeline_mode<synchronous>, transform_indices = @transform_1, window_bounds = array<i64: 1, 4>}, {pipeline_mode = #tpu.pipeline_mode<synchronous>, transform_indices = @transform_2, window_bounds = array<i64: 1, 4>}, {transform_indices = @transform_3, window_bounds = array<i64: 4, 128>}, {transform_indices = @transform_4, window_bounds = array<i64: 1, 128>}, {transform_indices = @transform_5, window_bounds = array<i64: 128, 128>}]} {
    %c0 = arith.constant 0 : index
    %c0_0 = arith.constant 0 : index
    %c0_1 = arith.constant 0 : index
    %0 = vector.load %arg2[%c0, %c0_0, %c0_1] : memref<4x128x4xf32, #tpu.memory_space<vmem>>, vector<4x128x4xf32>
    %1 = vector.shape_cast %0 : vector<4x128x4xf32> to vector<512x4xf32>
    %c0_2 = arith.constant 0 : index
    %c0_3 = arith.constant 0 : index
    %2 = vector.load %arg3[%c0_2, %c0_3] : memref<1x4xf32, #tpu.memory_space<vmem>>, vector<1x4xf32>
    %3 = vector.broadcast %2 : vector<1x4xf32> to vector<512x4xf32>
    %4 = arith.mulf %1, %3 : vector<512x4xf32>
    %c0_4 = arith.constant 0 : index
    %c0_5 = arith.constant 0 : index
    %5 = vector.load %arg4[%c0_4, %c0_5] : memref<1x4xf32, #tpu.memory_space<vmem>>, vector<1x4xf32>
    %6 = vector.broadcast %5 : vector<1x4xf32> to vector<512x4xf32>
    %7 = arith.addf %4, %6 : vector<512x4xf32>
    %cst = arith.constant 0.000000e+00 : f32
    %8 = vector.broadcast %cst : f32 to vector<512x4xf32>
    %9 = arith.maximumf %7, %8 : vector<512x4xf32>
    %c0_6 = arith.constant 0 : index
    %c0_7 = arith.constant 0 : index
    %10 = vector.load %arg5[%c0_6, %c0_7] : memref<4x128xf32, #tpu.memory_space<vmem>>, vector<4x128xf32>
    %cst_8 = arith.constant dense<0.000000e+00> : vector<512x128xf32>
    %11 = tpu.matmul %9, %10, %cst_8 {dimension_numbers = #tpu.dot_dimension_numbers<[1], [0], [0], [1], [0, 0, 1, 1], [], []>} : vector<512x4xf32>, vector<4x128xf32>, vector<512x128xf32> -> vector<512x128xf32>
    %12 = vector.extract_strided_slice %11 {offsets = [0, 0], sizes = [128, 128], strides = [1, 1]} : vector<512x128xf32> to vector<128x128xf32>
    %13 = vector.extract_strided_slice %11 {offsets = [128, 0], sizes = [128, 128], strides = [1, 1]} : vector<512x128xf32> to vector<128x128xf32>
    %14 = arith.maximumf %12, %13 : vector<128x128xf32>
    %15 = vector.extract_strided_slice %11 {offsets = [256, 0], sizes = [128, 128], strides = [1, 1]} : vector<512x128xf32> to vector<128x128xf32>
    %16 = vector.extract_strided_slice %11 {offsets = [384, 0], sizes = [128, 128], strides = [1, 1]} : vector<512x128xf32> to vector<128x128xf32>
    %17 = arith.maximumf %15, %16 : vector<128x128xf32>
    %18 = arith.maximumf %14, %17 : vector<128x128xf32>
    %c0_9 = arith.constant 0 : index
    %c0_10 = arith.constant 0 : index
    %19 = vector.load %arg6[%c0_9, %c0_10] : memref<1x128xf32, #tpu.memory_space<vmem>>, vector<1x128xf32>
    %20 = vector.broadcast %19 : vector<1x128xf32> to vector<128x128xf32>
    %21 = arith.addf %18, %20 : vector<128x128xf32>
    %c0_11 = arith.constant 0 : index
    %c0_12 = arith.constant 0 : index
    %22 = vector.load %arg7[%c0_11, %c0_12] : memref<128x128xf32, #tpu.memory_space<vmem>>, vector<128x128xf32>
    tpu.vector_store %arg7[%c0_11, %c0_12], %21 {strides = array<i32>} : memref<128x128xf32, #tpu.memory_space<vmem>>, vector<128x128xf32>,
    return
  }
  func.func @transform_0(%arg0: i32, %arg1: i32) -> (i32, i32, i32) {
    %c0_i32 = arith.constant 0 : i32
    %c0_i32_0 = arith.constant 0 : i32
    %c0_i32_1 = arith.constant 0 : i32
    return %c0_i32, %arg0, %c0_i32_0 : i32, i32, i32
  }
  func.func @transform_1(%arg0: i32, %arg1: i32) -> (i32, i32) {
    %c0_i32 = arith.constant 0 : i32
    %c0_i32_0 = arith.constant 0 : i32
    %c0_i32_1 = arith.constant 0 : i32
    return %c0_i32, %c0_i32_0 : i32, i32
  }
  func.func @transform_2(%arg0: i32, %arg1: i32) -> (i32, i32) {
    %c0_i32 = arith.constant 0 : i32
    %c0_i32_0 = arith.constant 0 : i32
    %c0_i32_1 = arith.constant 0 : i32
    return %c0_i32, %c0_i32_0 : i32, i32
  }
  func.func @transform_3(%arg0: i32, %arg1: i32) -> (i32, i32) {
    %c0_i32 = arith.constant 0 : i32
    %c0_i32_0 = arith.constant 0 : i32
    return %c0_i32, %arg1 : i32, i32
  }
  func.func @transform_4(%arg0: i32, %arg1: i32) -> (i32, i32) {
    %c0_i32 = arith.constant 0 : i32
    %c0_i32_0 = arith.constant 0 : i32
    return %c0_i32, %arg1 : i32, i32
  }
  func.func @transform_5(%arg0: i32, %arg1: i32) -> (i32, i32) {
    %c0_i32 = arith.constant 0 : i32
    return %arg0, %arg1 : i32, i32
  }
}

</mosaic_0001>

<llo_original>
// kernel: tpu_custom_call.1
$region0: #{tpu_custom_call.1}
  #allocation0 [shape = 'u32[]', space=smem, size = 0x4, offset = 0x4, fixed_abs, tag = 'smem constant byte address 0x4 - core index']
  #allocation1 [shape = 'u32[72,128]{1,0:T(1,128)}', space=vmem, size = 0x9000, scoped, tag = 'internal scratch']
  %s0 = inlined_call_operand.vmem [shape: f32[4,128,4], index: 0, kind: input, shape index: {}]
  %s1 = inlined_call_operand.vmem [shape: f32[1,4], index: 1, kind: input, shape index: {}]
  %s2 = inlined_call_operand.vmem [shape: f32[1,4], index: 2, kind: input, shape index: {}]
  %s3 = inlined_call_operand.vmem [shape: f32[4,128], index: 3, kind: input, shape index: {}]
  %s4 = inlined_call_operand.vmem [shape: f32[1,128], index: 4, kind: input, shape index: {}]
  %s5 = inlined_call_operand.hbm [shape: f32[128,128], index: 5, kind: output, shape index: {}]
  %s6 = sld [smem:[#allocation0]]
  $region30: #{tpu_custom_call.1} parent=0
    _
  %s8 = ssub.s32 1, %s6
  %s9 = scalar_select 0, %s8, %s6
  $region1: #{tpu_custom_call.1} parent=0
    #allocation2 [shape = 'u8[65536]{0}', space=vmem, size = 0x10000, scoped, tag = 'output window, operand 0, single buffered']
    #allocation3 [shape = 's32[1]{0}', space=sflag, size = 0x4, scoped, tag = 'scoped memory for tpu_custom_call.1']
    %10 = vsyncpa [#allocation3], 0
    // Predicated region
    $region2: #{tpu_custom_call.1} parent=1 // pred_check
      _
    $region3: #{tpu_custom_call.1} parent=1 // pred_check_branch
      %12 = sbr.rel (0) target = $region5
    $region4: #{tpu_custom_call.1} parent=1 // pred_region
      _
    $region5: #{tpu_custom_call.1} parent=1 // pred_fallthru
      _
    // Predicated region
    $region6: #{tpu_custom_call.1} parent=1 // pred_check
      _
    $region7: #{tpu_custom_call.1} parent=1 // pred_check_branch
      %14 = sbr.rel (0) target = $region9
    $region8: #{tpu_custom_call.1} parent=1 // pred_region
      _
    $region9: #{tpu_custom_call.1} parent=1 // pred_fallthru
      _
    // Predicated region
    $region10: #{tpu_custom_call.1} parent=1 // pred_check
      _
    $region11: #{tpu_custom_call.1} parent=1 // pred_check_branch
      %16 = sbr.rel (0) target = $region13
    $region12: #{tpu_custom_call.1} parent=1 // pred_region
      _
    $region13: #{tpu_custom_call.1} parent=1 // pred_fallthru
      _
    // Predicated region
    $region14: #{tpu_custom_call.1} parent=1 // pred_check
      _
    $region15: #{tpu_custom_call.1} parent=1 // pred_check_branch
      %18 = sbr.rel (0) target = $region17
    $region16: #{tpu_custom_call.1} parent=1 // pred_region
      _
    $region17: #{tpu_custom_call.1} parent=1 // pred_fallthru
      _
    // Predicated region
    $region18: #{tpu_custom_call.1} parent=1 // pred_check
      _
    $region19: #{tpu_custom_call.1} parent=1 // pred_check_branch
      %20 = sbr.rel (0) target = $region21
    $region20: #{tpu_custom_call.1} parent=1 // pred_region
      _
    $region21: #{tpu_custom_call.1} parent=1 // pred_fallthru
      _
    %v21 = vld [vmem:[%s0] sm:$0xff]
    %v22 = vld [vmem:[%s0 + $0x8] sm:$0xff]
    %v23 = vld [vmem:[%s0 + $0x10] sm:$0xff]
    %v24 = vld [vmem:[%s0 + $0x18] sm:$0xff]
    %v25 = vld [vmem:[%s0 + $0x20] sm:$0xff]
    %v26 = vld [vmem:[%s0 + $0x28] sm:$0xff]
    %v27 = vld [vmem:[%s0 + $0x30] sm:$0xff]
    %v28 = vld [vmem:[%s0 + $0x38] sm:$0xff]
    %v29 = vld [vmem:[%s0 + $0x40] sm:$0xff]
    %v30 = vld [vmem:[%s0 + $0x48] sm:$0xff]
    %v31 = vld [vmem:[%s0 + $0x50] sm:$0xff]
    %v32 = vld [vmem:[%s0 + $0x58] sm:$0xff]
    %v33 = vld [vmem:[%s0 + $0x60] sm:$0xff]
    %v34 = vld [vmem:[%s0 + $0x68] sm:$0xff]
    %v35 = vld [vmem:[%s0 + $0x70] sm:$0xff]
    %v36 = vld [vmem:[%s0 + $0x78] sm:$0xff]
    %v37 = vld [vmem:[%s0 + $0x80] sm:$0xff]
    %v38 = vld [vmem:[%s0 + $0x88] sm:$0xff]
    %v39 = vld [vmem:[%s0 + $0x90] sm:$0xff]
    %v40 = vld [vmem:[%s0 + $0x98] sm:$0xff]
    %v41 = vld [vmem:[%s0 + $0xa0] sm:$0xff]
    %v42 = vld [vmem:[%s0 + $0xa8] sm:$0xff]
    %v43 = vld [vmem:[%s0 + $0xb0] sm:$0xff]
    %v44 = vld [vmem:[%s0 + $0xb8] sm:$0xff]
    %v45 = vld [vmem:[%s0 + $0xc0] sm:$0xff]
    %v46 = vld [vmem:[%s0 + $0xc8] sm:$0xff]
    %v47 = vld [vmem:[%s0 + $0xd0] sm:$0xff]
    %v48 = vld [vmem:[%s0 + $0xd8] sm:$0xff]
    %v49 = vld [vmem:[%s0 + $0xe0] sm:$0xff]
    %v50 = vld [vmem:[%s0 + $0xe8] sm:$0xff]
    %v51 = vld [vmem:[%s0 + $0xf0] sm:$0xff]
    %v52 = vld [vmem:[%s0 + $0xf8] sm:$0xff]
    %v53 = vld [vmem:[%s0 + $0x100] sm:$0xff]
    %v54 = vld [vmem:[%s0 + $0x108] sm:$0xff]
    %v55 = vld [vmem:[%s0 + $0x110] sm:$0xff]
    %v56 = vld [vmem:[%s0 + $0x118] sm:$0xff]
    %v57 = vld [vmem:[%s0 + $0x120] sm:$0xff]
    %v58 = vld [vmem:[%s0 + $0x128] sm:$0xff]
    %v59 = vld [vmem:[%s0 + $0x130] sm:$0xff]
    %v60 = vld [vmem:[%s0 + $0x138] sm:$0xff]
    %v61 = vld [vmem:[%s0 + $0x140] sm:$0xff]
    %v62 = vld [vmem:[%s0 + $0x148] sm:$0xff]
    %v63 = vld [vmem:[%s0 + $0x150] sm:$0xff]
    %v64 = vld [vmem:[%s0 + $0x158] sm:$0xff]
    %v65 = vld [vmem:[%s0 + $0x160] sm:$0xff]
    %v66 = vld [vmem:[%s0 + $0x168] sm:$0xff]
    %v67 = vld [vmem:[%s0 + $0x170] sm:$0xff]
    %v68 = vld [vmem:[%s0 + $0x178] sm:$0xff]
    %v69 = vld [vmem:[%s0 + $0x180] sm:$0xff]
    %v70 = vld [vmem:[%s0 + $0x188] sm:$0xff]
    %v71 = vld [vmem:[%s0 + $0x190] sm:$0xff]
    %v72 = vld [vmem:[%s0 + $0x198] sm:$0xff]
    %v73 = vld [vmem:[%s0 + $0x1a0] sm:$0xff]
    %v74 = vld [vmem:[%s0 + $0x1a8] sm:$0xff]
    %v75 = vld [vmem:[%s0 + $0x1b0] sm:$0xff]
    %v76 = vld [vmem:[%s0 + $0x1b8] sm:$0xff]
    %v77 = vld [vmem:[%s0 + $0x1c0] sm:$0xff]
    %v78 = vld [vmem:[%s0 + $0x1c8] sm:$0xff]
    %v79 = vld [vmem:[%s0 + $0x1d0] sm:$0xff]
    %v80 = vld [vmem:[%s0 + $0x1d8] sm:$0xff]
    %v81 = vld [vmem:[%s0 + $0x1e0] sm:$0xff]
    %v82 = vld [vmem:[%s0 + $0x1e8] sm:$0xff]
    %v83 = vld [vmem:[%s0 + $0x1f0] sm:$0xff]
    %v84 = vld [vmem:[%s0 + $0x1f8] sm:$0xff]
    %v85 = vld [vmem:[%s1] sm:$0x1]
    %v87 = vperm.slane %v85, 0
    %v89 = vmul.f32 %v21, %v87
    %v90 = vmul.f32 %v22, %v87
    %v91 = vmul.f32 %v23, %v87
    %v92 = vmul.f32 %v24, %v87
    %v93 = vmul.f32 %v25, %v87
    %v94 = vmul.f32 %v26, %v87
    %v95 = vmul.f32 %v27, %v87
    %v96 = vmul.f32 %v28, %v87
    %v97 = vmul.f32 %v29, %v87
    %v98 = vmul.f32 %v30, %v87
    %v99 = vmul.f32 %v31, %v87
    %v100 = vmul.f32 %v32, %v87
    %v101 = vmul.f32 %v33, %v87
    %v102 = vmul.f32 %v34, %v87
    %v103 = vmul.f32 %v35, %v87
    %v104 = vmul.f32 %v36, %v87
    %v105 = vmul.f32 %v37, %v87
    %v106 = vmul.f32 %v38, %v87
    %v107 = vmul.f32 %v39, %v87
    %v108 = vmul.f32 %v40, %v87
    %v109 = vmul.f32 %v41, %v87
    %v110 = vmul.f32 %v42, %v87
    %v111 = vmul.f32 %v43, %v87
    %v112 = vmul.f32 %v44, %v87
    %v113 = vmul.f32 %v45, %v87
    %v114 = vmul.f32 %v46, %v87
    %v115 = vmul.f32 %v47, %v87
    %v116 = vmul.f32 %v48, %v87
    %v117 = vmul.f32 %v49, %v87
    %v118 = vmul.f32 %v50, %v87
    %v119 = vmul.f32 %v51, %v87
    %v120 = vmul.f32 %v52, %v87
    %v121 = vmul.f32 %v53, %v87
    %v122 = vmul.f32 %v54, %v87
    %v123 = vmul.f32 %v55, %v87
    %v124 = vmul.f32 %v56, %v87
    %v125 = vmul.f32 %v57, %v87
    %v126 = vmul.f32 %v58, %v87
    %v127 = vmul.f32 %v59, %v87
    %v128 = vmul.f32 %v60, %v87
    %v129 = vmul.f32 %v61, %v87
    %v130 = vmul.f32 %v62, %v87
    %v131 = vmul.f32 %v63, %v87
    %v132 = vmul.f32 %v64, %v87
    %v133 = vmul.f32 %v65, %v87
    %v134 = vmul.f32 %v66, %v87
    %v135 = vmul.f32 %v67, %v87
    %v136 = vmul.f32 %v68, %v87
    %v137 = vmul.f32 %v69, %v87
    %v138 = vmul.f32 %v70, %v87
    %v139 = vmul.f32 %v71, %v87
    %v140 = vmul.f32 %v72, %v87
    %v141 = vmul.f32 %v73, %v87
    %v142 = vmul.f32 %v74, %v87
    %v143 = vmul.f32 %v75, %v87
    %v144 = vmul.f32 %v76, %v87
    %v145 = vmul.f32 %v77, %v87
    %v146 = vmul.f32 %v78, %v87
    %v147 = vmul.f32 %v79, %v87
    %v148 = vmul.f32 %v80, %v87
    %v149 = vmul.f32 %v81, %v87
    %v150 = vmul.f32 %v82, %v87
    %v151 = vmul.f32 %v83, %v87
    %v152 = vmul.f32 %v84, %v87
    %v153 = vld [vmem:[%s2] sm:$0x1]
    %v155 = vperm.slane %v153, 0
    %v157 = vadd.f32 %v89, %v155
    %v158 = vadd.f32 %v90, %v155
    %v159 = vadd.f32 %v91, %v155
    %v160 = vadd.f32 %v92, %v155
    %v161 = vadd.f32 %v93, %v155
    %v162 = vadd.f32 %v94, %v155
    %v163 = vadd.f32 %v95, %v155
    %v164 = vadd.f32 %v96, %v155
    %v165 = vadd.f32 %v97, %v155
    %v166 = vadd.f32 %v98, %v155
    %v167 = vadd.f32 %v99, %v155
    %v168 = vadd.f32 %v100, %v155
    %v169 = vadd.f32 %v101, %v155
    %v170 = vadd.f32 %v102, %v155
    %v171 = vadd.f32 %v103, %v155
    %v172 = vadd.f32 %v104, %v155
    %v173 = vadd.f32 %v105, %v155
    %v174 = vadd.f32 %v106, %v155
    %v175 = vadd.f32 %v107, %v155
    %v176 = vadd.f32 %v108, %v155
    %v177 = vadd.f32 %v109, %v155
    %v178 = vadd.f32 %v110, %v155
    %v179 = vadd.f32 %v111, %v155
    %v180 = vadd.f32 %v112, %v155
    %v181 = vadd.f32 %v113, %v155
    %v182 = vadd.f32 %v114, %v155
    %v183 = vadd.f32 %v115, %v155
    %v184 = vadd.f32 %v116, %v155
    %v185 = vadd.f32 %v117, %v155
    %v186 = vadd.f32 %v118, %v155
    %v187 = vadd.f32 %v119, %v155
    %v188 = vadd.f32 %v120, %v155
    %v189 = vadd.f32 %v121, %v155
    %v190 = vadd.f32 %v122, %v155
    %v191 = vadd.f32 %v123, %v155
    %v192 = vadd.f32 %v124, %v155
    %v193 = vadd.f32 %v125, %v155
    %v194 = vadd.f32 %v126, %v155
    %v195 = vadd.f32 %v127, %v155
    %v196 = vadd.f32 %v128, %v155
    %v197 = vadd.f32 %v129, %v155
    %v198 = vadd.f32 %v130, %v155
    %v199 = vadd.f32 %v131, %v155
    %v200 = vadd.f32 %v132, %v155
    %v201 = vadd.f32 %v133, %v155
    %v202 = vadd.f32 %v134, %v155
    %v203 = vadd.f32 %v135, %v155
    %v204 = vadd.f32 %v136, %v155
    %v205 = vadd.f32 %v137, %v155
    %v206 = vadd.f32 %v138, %v155
    %v207 = vadd.f32 %v139, %v155
    %v208 = vadd.f32 %v140, %v155
    %v209 = vadd.f32 %v141, %v155
    %v210 = vadd.f32 %v142, %v155
    %v211 = vadd.f32 %v143, %v155
    %v212 = vadd.f32 %v144, %v155
    %v213 = vadd.f32 %v145, %v155
    %v214 = vadd.f32 %v146, %v155
    %v215 = vadd.f32 %v147, %v155
    %v216 = vadd.f32 %v148, %v155
    %v217 = vadd.f32 %v149, %v155
    %v218 = vadd.f32 %v150, %v155
    %v219 = vadd.f32 %v151, %v155
    %v220 = vadd.f32 %v152, %v155
    %v221 = vmax.f32 %v157, 0.0
    %v222 = vmax.f32 %v158, 0.0
    %v223 = vmax.f32 %v159, 0.0
    %v224 = vmax.f32 %v160, 0.0
    %v225 = vmax.f32 %v161, 0.0
    %v226 = vmax.f32 %v162, 0.0
    %v227 = vmax.f32 %v163, 0.0
    %v228 = vmax.f32 %v164, 0.0
    %v229 = vmax.f32 %v165, 0.0
    %v230 = vmax.f32 %v166, 0.0
    %v231 = vmax.f32 %v167, 0.0
    %v232 = vmax.f32 %v168, 0.0
    %v233 = vmax.f32 %v169, 0.0
    %v234 = vmax.f32 %v170, 0.0
    %v235 = vmax.f32 %v171, 0.0
    %v236 = vmax.f32 %v172, 0.0
    %v237 = vmax.f32 %v173, 0.0
    %v238 = vmax.f32 %v174, 0.0
    %v239 = vmax.f32 %v175, 0.0
    %v240 = vmax.f32 %v176, 0.0
    %v241 = vmax.f32 %v177, 0.0
    %v242 = vmax.f32 %v178, 0.0
    %v243 = vmax.f32 %v179, 0.0
    %v244 = vmax.f32 %v180, 0.0
    %v245 = vmax.f32 %v181, 0.0
    %v246 = vmax.f32 %v182, 0.0
    %v247 = vmax.f32 %v183, 0.0
    %v248 = vmax.f32 %v184, 0.0
    %v249 = vmax.f32 %v185, 0.0
    %v250 = vmax.f32 %v186, 0.0
    %v251 = vmax.f32 %v187, 0.0
    %v252 = vmax.f32 %v188, 0.0
    %v253 = vmax.f32 %v189, 0.0
    %v254 = vmax.f32 %v190, 0.0
    %v255 = vmax.f32 %v191, 0.0
    %v256 = vmax.f32 %v192, 0.0
    %v257 = vmax.f32 %v193, 0.0
    %v258 = vmax.f32 %v194, 0.0
    %v259 = vmax.f32 %v195, 0.0
    %v260 = vmax.f32 %v196, 0.0
    %v261 = vmax.f32 %v197, 0.0
    %v262 = vmax.f32 %v198, 0.0
    %v263 = vmax.f32 %v199, 0.0
    %v264 = vmax.f32 %v200, 0.0
    %v265 = vmax.f32 %v201, 0.0
    %v266 = vmax.f32 %v202, 0.0
    %v267 = vmax.f32 %v203, 0.0
    %v268 = vmax.f32 %v204, 0.0
    %v269 = vmax.f32 %v205, 0.0
    %v270 = vmax.f32 %v206, 0.0
    %v271 = vmax.f32 %v207, 0.0
    %v272 = vmax.f32 %v208, 0.0
    %v273 = vmax.f32 %v209, 0.0
    %v274 = vmax.f32 %v210, 0.0
    %v275 = vmax.f32 %v211, 0.0
    %v276 = vmax.f32 %v212, 0.0
    %v277 = vmax.f32 %v213, 0.0
    %v278 = vmax.f32 %v214, 0.0
    %v279 = vmax.f32 %v215, 0.0
    %v280 = vmax.f32 %v216, 0.0
    %v281 = vmax.f32 %v217, 0.0
    %v282 = vmax.f32 %v218, 0.0
    %v283 = vmax.f32 %v219, 0.0
    %v284 = vmax.f32 %v220, 0.0
    %v285 = vld [vmem:[%s3] sm:$0xf]
    %vm286 = vcmask 31744
    %v288 = vsel %vm286, %v221, 0
    %v291 = vsel %vm286, %v222, 0
    %v294 = vsel %vm286, %v223, 0
    %v297 = vsel %vm286, %v224, 0
    %v300 = vsel %vm286, %v225, 0
    %v303 = vsel %vm286, %v226, 0
    %v306 = vsel %vm286, %v227, 0
    %v309 = vsel %vm286, %v228, 0
    %v312 = vsel %vm286, %v229, 0
    %v315 = vsel %vm286, %v230, 0
    %v318 = vsel %vm286, %v231, 0
    %v321 = vsel %vm286, %v232, 0
    %v324 = vsel %vm286, %v233, 0
    %v327 = vsel %vm286, %v234, 0
    %v330 = vsel %vm286, %v235, 0
    %v333 = vsel %vm286, %v236, 0
    %v336 = vsel %vm286, %v237, 0
    %v339 = vsel %vm286, %v238, 0
    %v342 = vsel %vm286, %v239, 0
    %v345 = vsel %vm286, %v240, 0
    %v348 = vsel %vm286, %v241, 0
    %v351 = vsel %vm286, %v242, 0
    %v354 = vsel %vm286, %v243, 0
    %v357 = vsel %vm286, %v244, 0
    %v360 = vsel %vm286, %v245, 0
    %v363 = vsel %vm286, %v246, 0
    %v366 = vsel %vm286, %v247, 0
    %v369 = vsel %vm286, %v248, 0
    %v372 = vsel %vm286, %v249, 0
    %v375 = vsel %vm286, %v250, 0
    %v378 = vsel %vm286, %v251, 0
    %v381 = vsel %vm286, %v252, 0
    %v384 = vsel %vm286, %v253, 0
    %v387 = vsel %vm286, %v254, 0
    %v390 = vsel %vm286, %v255, 0
    %v393 = vsel %vm286, %v256, 0
    %v396 = vsel %vm286, %v257, 0
    %v399 = vsel %vm286, %v258, 0
    %v402 = vsel %vm286, %v259, 0
    %v405 = vsel %vm286, %v260, 0
    %v408 = vsel %vm286, %v261, 0
    %v411 = vsel %vm286, %v262, 0
    %v414 = vsel %vm286, %v263, 0
    %v417 = vsel %vm286, %v264, 0
    %v420 = vsel %vm286, %v265, 0
    %v423 = vsel %vm286, %v266, 0
    %v426 = vsel %vm286, %v267, 0
    %v429 = vsel %vm286, %v268, 0
    %v432 = vsel %vm286, %v269, 0
    %v435 = vsel %vm286, %v270, 0
    %v438 = vsel %vm286, %v271, 0
    %v441 = vsel %vm286, %v272, 0
    %v444 = vsel %vm286, %v273, 0
    %v447 = vsel %vm286, %v274, 0
    %v450 = vsel %vm286, %v275, 0
    %v453 = vsel %vm286, %v276, 0
    %v456 = vsel %vm286, %v277, 0
    %v459 = vsel %vm286, %v278, 0
    %v462 = vsel %vm286, %v279, 0
    %v465 = vsel %vm286, %v280, 0
    %v468 = vsel %vm286, %v281, 0
    %v471 = vsel %vm286, %v282, 0
    %v474 = vsel %vm286, %v283, 0
    %v477 = vsel %vm286, %v284, 0
    %vm479 = vcmask 1043456
    %v481 = vsel %vm479, %v285, 0
    %483 = vmatpush.msra.mxu0 0.0
    %484 = vmatpush.msra.mxu0 0.0
    %485 = vmatpush.msra.mxu0 0.0
    %486 = vmatpush.msra.mxu0 0.0
    %487 = vmatpush.msra.mxu0 0.0
    %488 = vmatpush.msra.mxu0 0.0
    %489 = vmatpush.msra.mxu0 0.0
    %490 = vmatpush.msra.mxu0 0.0
    %491 = vmatpush.msra.mxu0 0.0
    %492 = vmatpush.msra.mxu0 0.0
    %493 = vmatpush.msra.mxu0 0.0
    %494 = vmatpush.msra.mxu0 0.0
    %495 = vmatpush.msra.mxu0 0.0
    %496 = vmatpush.msra.mxu0 0.0
    %497 = vmatpush.msra.mxu0 0.0
    %498 = vmatpush.msra.mxu0 %v481
    %499 = vmatmul.f32.gmra.mxu0 %v288
    %v500 = vpop.f32.mrf.mxu0
    %v501 = vadd.f32 0.0, %v500
    %502 = vmatmul.f32.gmra.mxu0 %v291
    %v503 = vpop.f32.mrf.mxu0
    %v504 = vadd.f32 0.0, %v503
    %505 = vmatmul.f32.gmra.mxu0 %v294
    %v506 = vpop.f32.mrf.mxu0
    %v507 = vadd.f32 0.0, %v506
    %508 = vmatmul.f32.gmra.mxu0 %v297
    %v509 = vpop.f32.mrf.mxu0
    %v510 = vadd.f32 0.0, %v509
    %511 = vmatmul.f32.gmra.mxu0 %v300
    %v512 = vpop.f32.mrf.mxu0
    %v513 = vadd.f32 0.0, %v512
    %514 = vmatmul.f32.gmra.mxu0 %v303
    %v515 = vpop.f32.mrf.mxu0
    %v516 = vadd.f32 0.0, %v515
    %517 = vmatmul.f32.gmra.mxu0 %v306
    %v518 = vpop.f32.mrf.mxu0
    %v519 = vadd.f32 0.0, %v518
    %520 = vmatmul.f32.gmra.mxu0 %v309
    %v521 = vpop.f32.mrf.mxu0
    %v522 = vadd.f32 0.0, %v521
    %523 = vmatmul.f32.gmra.mxu0 %v312
    %v524 = vpop.f32.mrf.mxu0
    %v525 = vadd.f32 0.0, %v524
    %526 = vmatmul.f32.gmra.mxu0 %v315
    %v527 = vpop.f32.mrf.mxu0
    %v528 = vadd.f32 0.0, %v527
    %529 = vmatmul.f32.gmra.mxu0 %v318
    %v530 = vpop.f32.mrf.mxu0
    %v531 = vadd.f32 0.0, %v530
    %532 = vmatmul.f32.gmra.mxu0 %v321
    %v533 = vpop.f32.mrf.mxu0
    %v534 = vadd.f32 0.0, %v533
    %535 = vmatmul.f32.gmra.mxu0 %v324
    %v536 = vpop.f32.mrf.mxu0
    %v537 = vadd.f32 0.0, %v536
    %538 = vmatmul.f32.gmra.mxu0 %v327
    %v539 = vpop.f32.mrf.mxu0
    %v540 = vadd.f32 0.0, %v539
    %541 = vmatmul.f32.gmra.mxu0 %v330
    %v542 = vpop.f32.mrf.mxu0
    %v543 = vadd.f32 0.0, %v542
    %544 = vmatmul.f32.gmra.mxu0 %v333
    %v545 = vpop.f32.mrf.mxu0
    %v546 = vadd.f32 0.0, %v545
    %547 = vmatmul.f32.gmra.mxu0 %v336
    %v548 = vpop.f32.mrf.mxu0
    %v549 = vadd.f32 0.0, %v548
    %550 = vmatmul.f32.gmra.mxu0 %v339
    %v551 = vpop.f32.mrf.mxu0
    %v552 = vadd.f32 0.0, %v551
    %553 = vmatmul.f32.gmra.mxu0 %v342
    %v554 = vpop.f32.mrf.mxu0
    %v555 = vadd.f32 0.0, %v554
    %556 = vmatmul.f32.gmra.mxu0 %v345
    %v557 = vpop.f32.mrf.mxu0
    %v558 = vadd.f32 0.0, %v557
    %559 = vmatmul.f32.gmra.mxu0 %v348
    %v560 = vpop.f32.mrf.mxu0
    %v561 = vadd.f32 0.0, %v560
    %562 = vmatmul.f32.gmra.mxu0 %v351
    %v563 = vpop.f32.mrf.mxu0
    %v564 = vadd.f32 0.0, %v563
    %565 = vmatmul.f32.gmra.mxu0 %v354
    %v566 = vpop.f32.mrf.mxu0
    %v567 = vadd.f32 0.0, %v566
    %568 = vmatmul.f32.gmra.mxu0 %v357
    %v569 = vpop.f32.mrf.mxu0
    %v570 = vadd.f32 0.0, %v569
    %571 = vmatmul.f32.gmra.mxu0 %v360
    %v572 = vpop.f32.mrf.mxu0
    %v573 = vadd.f32 0.0, %v572
    %574 = vmatmul.f32.gmra.mxu0 %v363
    %v575 = vpop.f32.mrf.mxu0
    %v576 = vadd.f32 0.0, %v575
    %577 = vmatmul.f32.gmra.mxu0 %v366
    %v578 = vpop.f32.mrf.mxu0
    %v579 = vadd.f32 0.0, %v578
    %580 = vmatmul.f32.gmra.mxu0 %v369
    %v581 = vpop.f32.mrf.mxu0
    %v582 = vadd.f32 0.0, %v581
    %583 = vmatmul.f32.gmra.mxu0 %v372
    %v584 = vpop.f32.mrf.mxu0
    %v585 = vadd.f32 0.0, %v584
    %586 = vmatmul.f32.gmra.mxu0 %v375
    %v587 = vpop.f32.mrf.mxu0
    %v588 = vadd.f32 0.0, %v587
    %589 = vmatmul.f32.gmra.mxu0 %v378
    %v590 = vpop.f32.mrf.mxu0
    %v591 = vadd.f32 0.0, %v590
    %592 = vmatmul.f32.gmra.mxu0 %v381
    %v593 = vpop.f32.mrf.mxu0
    %v594 = vadd.f32 0.0, %v593
    %595 = vmatmul.f32.gmra.mxu0 %v384
    %v596 = vpop.f32.mrf.mxu0
    %v597 = vadd.f32 0.0, %v596
    %598 = vmatmul.f32.gmra.mxu0 %v387
    %v599 = vpop.f32.mrf.mxu0
    %v600 = vadd.f32 0.0, %v599
    %601 = vmatmul.f32.gmra.mxu0 %v390
    %v602 = vpop.f32.mrf.mxu0
    %v603 = vadd.f32 0.0, %v602
    %604 = vmatmul.f32.gmra.mxu0 %v393
    %v605 = vpop.f32.mrf.mxu0
    %v606 = vadd.f32 0.0, %v605
    %607 = vmatmul.f32.gmra.mxu0 %v396
    %v608 = vpop.f32.mrf.mxu0
    %v609 = vadd.f32 0.0, %v608
    %610 = vmatmul.f32.gmra.mxu0 %v399
    %v611 = vpop.f32.mrf.mxu0
    %v612 = vadd.f32 0.0, %v611
    %613 = vmatmul.f32.gmra.mxu0 %v402
    %v614 = vpop.f32.mrf.mxu0
    %v615 = vadd.f32 0.0, %v614
    %616 = vmatmul.f32.gmra.mxu0 %v405
    %v617 = vpop.f32.mrf.mxu0
    %v618 = vadd.f32 0.0, %v617
    %619 = vmatmul.f32.gmra.mxu0 %v408
    %v620 = vpop.f32.mrf.mxu0
    %v621 = vadd.f32 0.0, %v620
    %622 = vmatmul.f32.gmra.mxu0 %v411
    %v623 = vpop.f32.mrf.mxu0
    %v624 = vadd.f32 0.0, %v623
    %625 = vmatmul.f32.gmra.mxu0 %v414
    %v626 = vpop.f32.mrf.mxu0
    %v627 = vadd.f32 0.0, %v626
    %628 = vmatmul.f32.gmra.mxu0 %v417
    %v629 = vpop.f32.mrf.mxu0
    %v630 = vadd.f32 0.0, %v629
    %631 = vmatmul.f32.gmra.mxu0 %v420
    %v632 = vpop.f32.mrf.mxu0
    %v633 = vadd.f32 0.0, %v632
    %634 = vmatmul.f32.gmra.mxu0 %v423
    %v635 = vpop.f32.mrf.mxu0
    %v636 = vadd.f32 0.0, %v635
    %637 = vmatmul.f32.gmra.mxu0 %v426
    %v638 = vpop.f32.mrf.mxu0
    %v639 = vadd.f32 0.0, %v638
    %640 = vmatmul.f32.gmra.mxu0 %v429
    %v641 = vpop.f32.mrf.mxu0
    %v642 = vadd.f32 0.0, %v641
    %643 = vmatmul.f32.gmra.mxu0 %v432
    %v644 = vpop.f32.mrf.mxu0
    %v645 = vadd.f32 0.0, %v644
    %646 = vmatmul.f32.gmra.mxu0 %v435
    %v647 = vpop.f32.mrf.mxu0
    %v648 = vadd.f32 0.0, %v647
    %649 = vmatmul.f32.gmra.mxu0 %v438
    %v650 = vpop.f32.mrf.mxu0
    %v651 = vadd.f32 0.0, %v650
    %652 = vmatmul.f32.gmra.mxu0 %v441
    %v653 = vpop.f32.mrf.mxu0
    %v654 = vadd.f32 0.0, %v653
    %655 = vmatmul.f32.gmra.mxu0 %v444
    %v656 = vpop.f32.mrf.mxu0
    %v657 = vadd.f32 0.0, %v656
    %658 = vmatmul.f32.gmra.mxu0 %v447
    %v659 = vpop.f32.mrf.mxu0
    %v660 = vadd.f32 0.0, %v659
    %661 = vmatmul.f32.gmra.mxu0 %v450
    %v662 = vpop.f32.mrf.mxu0
    %v663 = vadd.f32 0.0, %v662
    %664 = vmatmul.f32.gmra.mxu0 %v453
    %v665 = vpop.f32.mrf.mxu0
    %v666 = vadd.f32 0.0, %v665
    %667 = vmatmul.f32.gmra.mxu0 %v456
    %v668 = vpop.f32.mrf.mxu0
    %v669 = vadd.f32 0.0, %v668
    %670 = vmatmul.f32.gmra.mxu0 %v459
    %v671 = vpop.f32.mrf.mxu0
    %v672 = vadd.f32 0.0, %v671
    %673 = vmatmul.f32.gmra.mxu0 %v462
    %v674 = vpop.f32.mrf.mxu0
    %v675 = vadd.f32 0.0, %v674
    %676 = vmatmul.f32.gmra.mxu0 %v465
    %v677 = vpop.f32.mrf.mxu0
    %v678 = vadd.f32 0.0, %v677
    %679 = vmatmul.f32.gmra.mxu0 %v468
    %v680 = vpop.f32.mrf.mxu0
    %v681 = vadd.f32 0.0, %v680
    %682 = vmatmul.f32.gmra.mxu0 %v471
    %v683 = vpop.f32.mrf.mxu0
    %v684 = vadd.f32 0.0, %v683
    %685 = vmatmul.f32.gmra.mxu0 %v474
    %v686 = vpop.f32.mrf.mxu0
    %v687 = vadd.f32 0.0, %v686
    %688 = vmatmul.f32.gmra.mxu0 %v477
    %v689 = vpop.f32.mrf.mxu0
    %v690 = vadd.f32 0.0, %v689
    %691 = vdwg.mxu0
    %v692 = vmax.f32 %v501, %v549
    %v693 = vmax.f32 %v504, %v552
    %v694 = vmax.f32 %v507, %v555
    %v695 = vmax.f32 %v510, %v558
    %v696 = vmax.f32 %v513, %v561
    %v697 = vmax.f32 %v516, %v564
    %v698 = vmax.f32 %v519, %v567
    %v699 = vmax.f32 %v522, %v570
    %v700 = vmax.f32 %v525, %v573
    %v701 = vmax.f32 %v528, %v576
    %v702 = vmax.f32 %v531, %v579
    %v703 = vmax.f32 %v534, %v582
    %v704 = vmax.f32 %v537, %v585
    %v705 = vmax.f32 %v540, %v588
    %v706 = vmax.f32 %v543, %v591
    %v707 = vmax.f32 %v546, %v594
    %v708 = vmax.f32 %v597, %v645
    %v709 = vmax.f32 %v600, %v648
    %v710 = vmax.f32 %v603, %v651
    %v711 = vmax.f32 %v606, %v654
    %v712 = vmax.f32 %v609, %v657
    %v713 = vmax.f32 %v612, %v660
    %v714 = vmax.f32 %v615, %v663
    %v715 = vmax.f32 %v618, %v666
    %v716 = vmax.f32 %v621, %v669
    %v717 = vmax.f32 %v624, %v672
    %v718 = vmax.f32 %v627, %v675
    %v719 = vmax.f32 %v630, %v678
    %v720 = vmax.f32 %v633, %v681
    %v721 = vmax.f32 %v636, %v684
    %v722 = vmax.f32 %v639, %v687
    %v723 = vmax.f32 %v642, %v690
    %v724 = vmax.f32 %v692, %v708
    %v725 = vmax.f32 %v693, %v709
    %v726 = vmax.f32 %v694, %v710
    %v727 = vmax.f32 %v695, %v711
    %v728 = vmax.f32 %v696, %v712
    %v729 = vmax.f32 %v697, %v713
    %v730 = vmax.f32 %v698, %v714
    %v731 = vmax.f32 %v699, %v715
    %v732 = vmax.f32 %v700, %v716
    %v733 = vmax.f32 %v701, %v717
    %v734 = vmax.f32 %v702, %v718
    %v735 = vmax.f32 %v703, %v719
    %v736 = vmax.f32 %v704, %v720
    %v737 = vmax.f32 %v705, %v721
    %v738 = vmax.f32 %v706, %v722
    %v739 = vmax.f32 %v707, %v723
    %v740 = vld [vmem:[%s4] sm:$0x1]
    %v742 = vperm.slane %v740, 0
    %v744 = vadd.f32 %v724, %v742
    %v745 = vadd.f32 %v725, %v742
    %v746 = vadd.f32 %v726, %v742
    %v747 = vadd.f32 %v727, %v742
    %v748 = vadd.f32 %v728, %v742
    %v749 = vadd.f32 %v729, %v742
    %v750 = vadd.f32 %v730, %v742
    %v751 = vadd.f32 %v731, %v742
    %v752 = vadd.f32 %v732, %v742
    %v753 = vadd.f32 %v733, %v742
    %v754 = vadd.f32 %v734, %v742
    %v755 = vadd.f32 %v735, %v742
    %v756 = vadd.f32 %v736, %v742
    %v757 = vadd.f32 %v737, %v742
    %v758 = vadd.f32 %v738, %v742
    %v759 = vadd.f32 %v739, %v742
    %760 = vst [vmem:[#allocation2] sm:$0xff] %v744
    %761 = vst [vmem:[#allocation2 + $0x8] sm:$0xff] %v745
    %762 = vst [vmem:[#allocation2 + $0x10] sm:$0xff] %v746
    %763 = vst [vmem:[#allocation2 + $0x18] sm:$0xff] %v747
    %764 = vst [vmem:[#allocation2 + $0x20] sm:$0xff] %v748
    %765 = vst [vmem:[#allocation2 + $0x28] sm:$0xff] %v749
    %766 = vst [vmem:[#allocation2 + $0x30] sm:$0xff] %v750
    %767 = vst [vmem:[#allocation2 + $0x38] sm:$0xff] %v751
    %768 = vst [vmem:[#allocation2 + $0x40] sm:$0xff] %v752
    %769 = vst [vmem:[#allocation2 + $0x48] sm:$0xff] %v753
    %770 = vst [vmem:[#allocation2 + $0x50] sm:$0xff] %v754
    %771 = vst [vmem:[#allocation2 + $0x58] sm:$0xff] %v755
    %772 = vst [vmem:[#allocation2 + $0x60] sm:$0xff] %v756
    %773 = vst [vmem:[#allocation2 + $0x68] sm:$0xff] %v757
    %774 = vst [vmem:[#allocation2 + $0x70] sm:$0xff] %v758
    %775 = vst [vmem:[#allocation2 + $0x78] sm:$0xff] %v759
    // Predicated region
    $region22: #{tpu_custom_call.1} parent=1 // pred_check
      _
    $region23: #{tpu_custom_call.1} parent=1 // pred_check_branch
      %777 = sbr.rel (0) target = $region25
    $region24: #{tpu_custom_call.1} parent=1 // pred_region
      %779 = vsyncadd [#allocation3], 0
      %s780 = sshll.u32 [#allocation2], 4
      %s781 = int_to_ptr.vmem [resolvable:$true] %s780
      %s782 = sshll.u32 %s5, 4
      %s783 = int_to_ptr.hbm [resolvable:$true] %s782
      %788 = dma.vmem_to_hbm [thread:$0]  %s781, 2048, %s783, [#allocation3], 128, 128, 8
    $region25: #{tpu_custom_call.1} parent=1 // pred_fallthru
      _
    // Predicated region
    $region26: #{tpu_custom_call.1} parent=1 // pred_check
      _
    $region27: #{tpu_custom_call.1} parent=1 // pred_check_branch
      %790 = sbr.rel (0) target = $region29
    $region28: #{tpu_custom_call.1} parent=1 // pred_region
      %792 = dma.done [#allocation3], 2048
    $region29: #{tpu_custom_call.1} parent=1 // pred_fallthru
      _
    %793 = vsyncpa [#allocation3], 1

</llo_original>
